<compile_context>
chip_gen: v7x
topology: tpu7x:2x2x1
jax: 0.10.0
libtpu: 0.0.40
codegen_flags: <defaults>
</compile_context>

<pallas_src>
import jax
import jax.numpy as jnp
from jax.experimental import pallas as pl
from jax.experimental.pallas import tpu as pltpu


# ----------------------------------------------------------------------------
# Pallas kernel:  out = x @ W'' + b''          (scale + residual pre-folded)
# ----------------------------------------------------------------------------
def _fused_affine_kernel(x_ref, w_ref, b_ref, o_ref):
    # x_ref : (TILE, W) f32       w_ref : (W, W) f32  (VMEM-resident)
    # b_ref : (1, W)    f32       o_ref : (TILE, W) f32
    o_ref[...] = (
        jnp.dot(x_ref[...], w_ref[...], preferred_element_type=jnp.float32)
        + b_ref[...]
    )


def choose_row_tile(rows, max_tile=4096):
    """Largest 8-multiple tile <= max_tile that divides `rows`; prefer grid >= 2
    so v7x's two TensorCores both get work."""
    if rows <= 8:
        return rows
    cands = [t for t in range(8, min(max_tile, rows) + 1, 8) if rows % t == 0]
    if not cands:
        # rows is padded to a multiple of 8 in the wrapper, so this only
        # triggers for huge prime-ish row counts; tail block is masked.
        return min(max_tile, rows)
    multi = [t for t in cands if rows // t >= 2]
    return max(multi) if multi else max(cands)


def fused_affine(x2d, w, b2d, *, max_tile_rows=4096, donate_x=False):
    """x2d: (R, W) f32, w: (W, W) f32, b2d: (1, W) f32 -> (R, W) f32."""
    R, W = x2d.shape
    assert w.shape == (W, W) and b2d.shape == (1, W)

    tile = choose_row_tile(R, max_tile_rows)
    grid = (pl.cdiv(R, tile),)

    itemsize = 4  # f32
    cost = pl.CostEstimate(
        flops=2 * R * W * W,
        transcendentals=0,
        bytes_accessed=itemsize * (2 * R * W + W * W + W),
    )

    return pl.pallas_call(
        _fused_affine_kernel,
        out_shape=jax.ShapeDtypeStruct((R, W), jnp.float32),
        grid=grid,
        in_specs=[
            pl.BlockSpec((tile, W), lambda i: (i, 0)),   # x tile (streams)
            pl.BlockSpec((W, W), lambda i: (0, 0)),      # weight (resident)
            pl.BlockSpec((1, W), lambda i: (0, 0)),      # bias   (resident)
        ],
        out_specs=pl.BlockSpec((tile, W), lambda i: (i, 0)),
        compiler_params=pltpu.CompilerParams(
            dimension_semantics=("parallel",),
            vmem_limit_bytes=32 * 1024 * 1024,
        ),
        cost_estimate=cost,
        # Alias x -> out only when the caller no longer needs x afterwards.
        input_output_aliases=({0: 0} if donate_x else {}),
    )(x2d, w, b2d)


# ----------------------------------------------------------------------------
# One-time parameter preparation (hoisted out of the per-step path)
# ----------------------------------------------------------------------------
def choose_lane_pack(dim_hid):
    """Pack P tokens per row so the lane (last) dim is a multiple of 128."""
    if dim_hid % 128 == 0:
        return 1
    if 128 % dim_hid == 0:
        return 128 // dim_hid
    return 1  # TODO(synk): F not dividing 128 -> masked stores (not hit here)


def fold_esg_linear_params(esg_linear_w, esg_linear_b, dim_hid, lane_pack,
                           scale=0.1):
    """Fold 3x channel replication, interleaved (F,3) layout, the 0.1 scale and
    the residual identity into one weight; then expand block-diagonally for
    lane-dense token packing."""
    F = dim_hid
    # Linear in-index j = 3f + c ; placeholder ESG replicates the channel, so
    #   W_eff[f, h] = sum_c W[h, 3f + c]
    w_eff = esg_linear_w.reshape(F, F, 3).sum(axis=-1).T          # (F, F)
    # Fold scale + residual identity:  out = x @ (0.1*W_eff + I) + 0.1*b
    w_fold = scale * w_eff + jnp.eye(F, dtype=w_eff.dtype)        # (F, F)
    b_fold = scale * esg_linear_b                                 # (F,)
    if lane_pack > 1:
        w_fold = jnp.kron(jnp.eye(lane_pack, dtype=w_fold.dtype), w_fold)
        b_fold = jnp.tile(b_fold, (lane_pack,))
    return w_fold, b_fold.reshape(1, -1)


# ----------------------------------------------------------------------------
# EncoderLayer forward (Encoder_ESG=True, Encoder_SGCN=False)
# ----------------------------------------------------------------------------
def encoder_layer_forward(x, w_packed, b_packed, lane_pack):
    """x: (B, T, N, dim_hid) f32 -> (B, T, N, dim_hid) f32."""
    B, T, N, F = x.shape
    M = B * T * N
    P = lane_pack

    # Pad the token axis to a multiple of 8*P so rows are 8-aligned and the
    # lane dim stays a dense multiple of 128 (no masked vst).
    pad_unit = 8 * P
    M_pad = ((M + pad_unit - 1) // pad_unit) * pad_unit
    x_tok = x.reshape(M, F)                       # pure row-major view
    if M_pad != M:
        x_tok = jnp.pad(x_tok, ((0, M_pad - M), (0, 0)))

    x2d = x_tok.reshape(M_pad // P, P * F)        # pure row-major view
    out2d = fused_affine(x2d, w_packed, b_packed)
    out = out2d.reshape(M_pad, F)
    if M_pad != M:
        out = out[:M]
    return out.reshape(B, T, N, F)


# ----------------------------------------------------------------------------
# Pure-JAX reference (original permute/reshape/broadcast chain, unfolded)
# ----------------------------------------------------------------------------
def reference_forward(x, w, b):
    B, T, N, F = x.shape
    x_p = jnp.transpose(x, (0, 2, 3, 1))[:, :, None, :, :].reshape(B * N, 1, F, T)
    esg = jnp.broadcast_to(x_p, (B * N, 3, F, T)).reshape(B, N, 3, F, T)
    esg = jnp.transpose(esg, (0, 4, 1, 3, 2)).reshape(B, T, N, F * 3)
    lin = esg @ w.T + b
    return 0.1 * lin + x


if __name__ == "__main__":
    # Small shapes consistent with forward(): (batch, T, N, dim_hid)
    B, T, N, dim_hid = 2, 8, 4, 32
    key = jax.random.PRNGKey(0)
    kx, kw, kb = jax.random.split(key, 3)

    x = jax.random.normal(kx, (B, T, N, dim_hid), dtype=jnp.float32)

    # Deterministic nn.Linear(dim_hid*3, dim_hid) init (PyTorch-style uniform).
    fan_in = dim_hid * 3
    bound = 1.0 / (fan_in ** 0.5)
    esg_linear_w = jax.random.uniform(kw, (dim_hid, fan_in), jnp.float32, -bound, bound)
    esg_linear_b = jax.random.uniform(kb, (dim_hid,), jnp.float32, -bound, bound)

    # One-time parameter prep (hoisted out of the per-call path).
    P = choose_lane_pack(dim_hid)
    w_packed, b_packed = fold_esg_linear_params(esg_linear_w, esg_linear_b, dim_hid, P)

    fwd = jax.jit(lambda xx, ww, bb: encoder_layer_forward(xx, ww, bb, lane_pack=P))
    out = fwd(x, w_packed, b_packed)
    out = jax.block_until_ready(out)

    ref = reference_forward(x, esg_linear_w, esg_linear_b)
    if not jnp.allclose(out, ref, atol=1e-3, rtol=1e-3):
        raise AssertionError("Pallas kernel output mismatch vs reference")

    print("KERNEL_OK")
</pallas_src>

<mosaic_0001>
module attributes {stable_mosaic.version = 11 : i64} {
  func.func @_fused_affine_kernel(%arg0: i32, %arg1: memref<8x128xf32, #tpu.memory_space<vmem>>, %arg2: memref<128x128xf32, #tpu.memory_space<vmem>>, %arg3: memref<1x128xf32, #tpu.memory_space<vmem>>, %arg4: memref<8x128xf32, #tpu.memory_space<vmem>>) attributes {dimension_semantics = [#tpu.dimension_semantics<parallel>], iteration_bounds = array<i64: 2>, scalar_prefetch = 0 : i64, scratch_operands = 0 : i64, tpu.core_type = #tpu.core_type<tc>, window_params = [{transform_indices = @transform_0, window_bounds = array<i64: 8, 128>}, {pipeline_mode = #tpu.pipeline_mode<synchronous>, transform_indices = @transform_1, window_bounds = array<i64: 128, 128>}, {pipeline_mode = #tpu.pipeline_mode<synchronous>, transform_indices = @transform_2, window_bounds = array<i64: 1, 128>}, {transform_indices = @transform_3, window_bounds = array<i64: 8, 128>}]} {
    %c0 = arith.constant 0 : index
    %c0_0 = arith.constant 0 : index
    %0 = vector.load %arg1[%c0, %c0_0] : memref<8x128xf32, #tpu.memory_space<vmem>>, vector<8x128xf32>
    %c0_1 = arith.constant 0 : index
    %c0_2 = arith.constant 0 : index
    %1 = vector.load %arg2[%c0_1, %c0_2] : memref<128x128xf32, #tpu.memory_space<vmem>>, vector<128x128xf32>
    %cst = arith.constant dense<0.000000e+00> : vector<8x128xf32>
    %2 = tpu.matmul %0, %1, %cst {dimension_numbers = #tpu.dot_dimension_numbers<[1], [0], [0], [1], [0, 0, 1, 1], [], []>} : vector<8x128xf32>, vector<128x128xf32>, vector<8x128xf32> -> vector<8x128xf32>
    %c0_3 = arith.constant 0 : index
    %c0_4 = arith.constant 0 : index
    %3 = vector.load %arg3[%c0_3, %c0_4] : memref<1x128xf32, #tpu.memory_space<vmem>>, vector<1x128xf32>
    %4 = vector.broadcast %3 : vector<1x128xf32> to vector<8x128xf32>
    %5 = arith.addf %2, %4 : vector<8x128xf32>
    %c0_5 = arith.constant 0 : index
    %c0_6 = arith.constant 0 : index
    %6 = vector.load %arg4[%c0_5, %c0_6] : memref<8x128xf32, #tpu.memory_space<vmem>>, vector<8x128xf32>
    tpu.vector_store %arg4[%c0_5, %c0_6], %5 {strides = array<i32>} : memref<8x128xf32, #tpu.memory_space<vmem>>, vector<8x128xf32>,
    return
  }
  func.func @transform_0(%arg0: i32) -> (i32, i32) {
    %c0_i32 = arith.constant 0 : i32
    %c0_i32_0 = arith.constant 0 : i32
    return %arg0, %c0_i32 : i32, i32
  }
  func.func @transform_1(%arg0: i32) -> (i32, i32) {
    %c0_i32 = arith.constant 0 : i32
    %c0_i32_0 = arith.constant 0 : i32
    %c0_i32_1 = arith.constant 0 : i32
    return %c0_i32, %c0_i32_0 : i32, i32
  }
  func.func @transform_2(%arg0: i32) -> (i32, i32) {
    %c0_i32 = arith.constant 0 : i32
    %c0_i32_0 = arith.constant 0 : i32
    %c0_i32_1 = arith.constant 0 : i32
    return %c0_i32, %c0_i32_0 : i32, i32
  }
  func.func @transform_3(%arg0: i32) -> (i32, i32) {
    %c0_i32 = arith.constant 0 : i32
    %c0_i32_0 = arith.constant 0 : i32
    return %arg0, %c0_i32 : i32, i32
  }
}

</mosaic_0001>

<llo_original>
// kernel: _lambda_.1
$region0: #{_lambda_.1}
  #allocation0 [shape = 'u32[]', space=smem, size = 0x4, offset = 0x4, fixed_abs, tag = 'smem constant byte address 0x4 - core index']
  #allocation1 [shape = 'u32[144,128]{1,0:T(1,128)}', space=vmem, size = 0x12000, scoped, tag = 'internal scratch']
  %s0 = inlined_call_operand.vmem [shape: f32[16,128], index: 0, kind: input, shape index: {}]
  %s1 = inlined_call_operand.hbm [shape: f32[128,128], index: 1, kind: input, shape index: {}]
  %s2 = inlined_call_operand.vmem [shape: f32[1,128], index: 2, kind: input, shape index: {}]
  %s3 = inlined_call_operand.vmem [shape: f32[16,128], index: 3, kind: output, shape index: {}]
  %s4 = sld [smem:[#allocation0]]
  $region49: #{_lambda_.1} parent=0
    _
  %s6 = ssub.s32 1, %s4
  %s7 = scalar_select 0, %s6, %s4
  $region1: #{_lambda_.1} parent=0
    #allocation2 [shape = 'u8[65536]{0}', space=vmem, size = 0x10000, scoped, tag = 'input window, operand 1, single buffered']
    #allocation3 [shape = 's32[2]{0}', space=sflag, size = 0x8, scoped, tag = 'scoped memory for _lambda_.1']
    %8 = vsyncpa [#allocation3], 0
    loop: start=0, step=1, limit=4
    $region2: #{_lambda_.1} parent=1 // loop_pre_header
      _
    $region3: #{_lambda_.1} parent=1 // loop_header
      %s10 = sphi 0, %s14
      %p11 = scmp.ge.s32.totalorder %s10, 4
      %s20 = sphi 0, %s22
      %s23 = sphi 0, %s20
      %s24 = sphi 0, %s23
      %s40 = sphi 0, %s24
      %s44 = sphi 0, %s44
      %s46 = sphi 0, %s44
      %s47 = sphi 0, %s46
      %s61 = sphi 0, %s47
      %s65 = sphi 0, %s65
      %s67 = sphi 0, %s65
      %s68 = sphi 0, %s67
      %s82 = sphi 0, %s68
      %s88 = sphi 0, %s90
      %s91 = sphi 0, %s88
      %s92 = sphi 0, %s91
      %s108 = sphi 0, %s92
    $region4: #{_lambda_.1} parent=1 // loop_header_branch
      %13 = sbr.rel (%p11) target = $region8
    $region5: #{_lambda_.1} parent=1 // loop_body
      %s15 = ssub.s32 %s10, 1
      %s16 = ssub.s32 %s10, 2
      %s17 = sadd.s32 %s10, 1
      %s18 = ssub.s32 %s10, %s17
      %p19 = scmp.eq.s32.totalorder %s18, 0
      %s21 = sadd.s32 %s20, 1
      %s22 = scalar_select %p19, %s20, %s21
      %p25 = pneg %p19
      %p26 = scmp.eq.s32.totalorder %s10, 1
      %p27 = por %p25, %p26
      %p28 = scmp.ne.s32.totalorder %s20, %s23
      %p29 = scmp.eq.s32.totalorder %s10, 0
      %p30 = por %p28, %p29
      %p31 = scmp.ne.s32.totalorder %s20, %s23
      %p32 = scmp.eq.s32.totalorder %s15, 1
      %p33 = por %p31, %p32
      %p34 = scmp.ne.s32.totalorder %s23, %s24
      %p35 = scmp.eq.s32.totalorder %s15, 0
      %p36 = por %p34, %p35
      %p37 = scmp.ne.s32.totalorder %s23, %s24
      %p38 = scmp.eq.s32.totalorder %s16, 1
      %p39 = por %p37, %p38
      %p41 = scmp.ne.s32.totalorder %s24, %s40
      %p42 = scmp.eq.s32.totalorder %s16, 0
      %p43 = por %p41, %p42
      %s45 = sadd.s32 %s44, 1
      %p48 = scmp.eq.s32.totalorder %s10, 1
      %p49 = scmp.ne.s32.totalorder %s44, %s46
      %p50 = scmp.eq.s32.totalorder %s10, 0
      %p51 = por %p49, %p50
      %p52 = scmp.ne.s32.totalorder %s44, %s46
      %p53 = scmp.eq.s32.totalorder %s15, 1
      %p54 = por %p52, %p53
      %p55 = scmp.ne.s32.totalorder %s46, %s47
      %p56 = scmp.eq.s32.totalorder %s15, 0
      %p57 = por %p55, %p56
      %p58 = scmp.ne.s32.totalorder %s46, %s47
      %p59 = scmp.eq.s32.totalorder %s16, 1
      %p60 = por %p58, %p59
      %p62 = scmp.ne.s32.totalorder %s47, %s61
      %p63 = scmp.eq.s32.totalorder %s16, 0
      %p64 = por %p62, %p63
      %s66 = sadd.s32 %s65, 1
      %p69 = scmp.eq.s32.totalorder %s10, 1
      %p70 = scmp.ne.s32.totalorder %s65, %s67
      %p71 = scmp.eq.s32.totalorder %s10, 0
      %p72 = por %p70, %p71
      %p73 = scmp.ne.s32.totalorder %s65, %s67
      %p74 = scmp.eq.s32.totalorder %s15, 1
      %p75 = por %p73, %p74
      %p76 = scmp.ne.s32.totalorder %s67, %s68
      %p77 = scmp.eq.s32.totalorder %s15, 0
      %p78 = por %p76, %p77
      %p79 = scmp.ne.s32.totalorder %s67, %s68
      %p80 = scmp.eq.s32.totalorder %s16, 1
      %p81 = por %p79, %p80
      %p83 = scmp.ne.s32.totalorder %s68, %s82
      %p84 = scmp.eq.s32.totalorder %s16, 0
      %p85 = por %p83, %p84
      %s86 = ssub.s32 %s10, %s17
      %p87 = scmp.eq.s32.totalorder %s86, 0
      %s89 = sadd.s32 %s88, 1
      %s90 = scalar_select %p87, %s88, %s89
      %p93 = pneg %p87
      %p94 = scmp.eq.s32.totalorder %s10, 1
      %p95 = por %p93, %p94
      %p96 = scmp.ne.s32.totalorder %s88, %s91
      %p97 = scmp.eq.s32.totalorder %s10, 0
      %p98 = por %p96, %p97
      %p99 = scmp.ne.s32.totalorder %s88, %s91
      %p100 = scmp.eq.s32.totalorder %s15, 1
      %p101 = por %p99, %p100
      %p102 = scmp.ne.s32.totalorder %s91, %s92
      %p103 = scmp.eq.s32.totalorder %s15, 0
      %p104 = por %p102, %p103
      %p105 = scmp.ne.s32.totalorder %s91, %s92
      %p106 = scmp.eq.s32.totalorder %s16, 1
      %p107 = por %p105, %p106
      %p109 = scmp.ne.s32.totalorder %s92, %s108
      %p110 = scmp.eq.s32.totalorder %s16, 0
      %p111 = por %p109, %p110
      %p112 = scmp.le.s32.totalorder 1, %s10
      %p113 = scmp.lt.s32.totalorder %s10, 3
      %p114 = pnand %p112, %p113
      %p115 = pneg %p114
      // Predicated region
      $region9: #{_lambda_.1} parent=5 // pred_check
        _
      $region10: #{_lambda_.1} parent=5 // pred_check_branch
        %117 = sbr.rel (%p114) target = $region12
      $region11: #{_lambda_.1} parent=5 // pred_region
        %s118 = ssub.s32 %s10, 1
        // Predicated region
        $region13: #{_lambda_.1} parent=11 // pred_check
          %p119 = pneg %p57
        $region14: #{_lambda_.1} parent=11 // pred_check_branch
          %121 = sbr.rel (%p119) target = $region16
        $region15: #{_lambda_.1} parent=11 // pred_region
          %s123 = ssub.s32 2048, 2048
          %124 = vsyncadd [#allocation3], %s123
          %s125 = sshll.u32 [#allocation2], 4
          %s126 = int_to_ptr.vmem [resolvable:$true] %s125
          %131 = dma.hbm_to_vmem [thread:$0]  %s1, 2048, %s126, [#allocation3], 128, 128, 8
        $region16: #{_lambda_.1} parent=11 // pred_fallthru
          _
        // Predicated region
        $region17: #{_lambda_.1} parent=11 // pred_check
          %p132 = pneg %p78
        $region18: #{_lambda_.1} parent=11 // pred_check_branch
          %134 = sbr.rel (%p132) target = $region20
        $region19: #{_lambda_.1} parent=11 // pred_region
          _
        $region20: #{_lambda_.1} parent=11 // pred_fallthru
          _
      $region12: #{_lambda_.1} parent=5 // pred_fallthru
        _
      %p135 = scmp.lt.s32.totalorder %s10, 2
      // Predicated region
      $region21: #{_lambda_.1} parent=5 // pred_check
        %p136 = pneg %p135
      $region22: #{_lambda_.1} parent=5 // pred_check_branch
        %138 = sbr.rel (%p136) target = $region24
      $region23: #{_lambda_.1} parent=5 // pred_region
        // Predicated region
        $region25: #{_lambda_.1} parent=23 // pred_check
          %p139 = pneg %p30
        $region26: #{_lambda_.1} parent=23 // pred_check_branch
          %141 = sbr.rel (%p139) target = $region28
        $region27: #{_lambda_.1} parent=23 // pred_region
          %p142 = scmp.lt.s32.totalorder %s10, 1
          %s143 = scalar_select %p142, %s10, 1
          %s144 = smul.addr %s143, 8
          %s145 = scalar_lea.vmem %s0, %s144
        $region28: #{_lambda_.1} parent=23 // pred_fallthru
          _
      $region24: #{_lambda_.1} parent=5 // pred_fallthru
        _
      %p146 = scmp.le.s32.totalorder 1, %s10
      %p147 = scmp.lt.s32.totalorder %s10, 3
      %p148 = pnand %p146, %p147
      %p149 = pneg %p148
      // Predicated region
      $region29: #{_lambda_.1} parent=5 // pred_check
        _
      $region30: #{_lambda_.1} parent=5 // pred_check_branch
        %151 = sbr.rel (%p148) target = $region32
      $region31: #{_lambda_.1} parent=5 // pred_region
        %s152 = ssub.s32 %s10, 1
        // Predicated region
        $region33: #{_lambda_.1} parent=31 // pred_check
          %p153 = pneg %p57
        $region34: #{_lambda_.1} parent=31 // pred_check_branch
          %155 = sbr.rel (%p153) target = $region36
        $region35: #{_lambda_.1} parent=31 // pred_region
          %156 = dma.done [#allocation3], 2048
        $region36: #{_lambda_.1} parent=31 // pred_fallthru
          _
        %p157 = scmp.lt.s32.totalorder %s15, 1
        %s158 = scalar_select %p157, %s15, 1
        %s159 = smul.addr %s158, 8
        %s160 = scalar_lea.vmem %s0, %s159
        %p161 = pneg %p36
        %p162 = pneg %p33
        %p163 = pneg %p57
        %p164 = pneg %p54
        %p165 = pneg %p78
        %p166 = pneg %p75
        %p167 = pneg %p104
        %p168 = pneg %p101
        %p169 = scmp.lt.s32.totalorder %s15, 1
        %s170 = scalar_select %p169, %s15, 1
        %s171 = smul.addr %s170, 8
        %s172 = scalar_lea.vmem %s3, %s171
        %p173 = scmp.lt.s32.totalorder %s15, 1
        %s174 = scalar_select %p173, %s15, 1
        %s175 = smul.addr %s174, 8
        %s176 = scalar_lea.vmem %s0, %s175
        %p177 = scmp.lt.s32.totalorder %s15, 1
        %s178 = scalar_select %p177, %s15, 1
        %s179 = smul.addr %s178, 8
        %s180 = scalar_lea.vmem %s3, %s179
        %v181 = vld [vmem:[%s176] sm:$0xff]
        %v182 = vld [vmem:[#allocation2] sm:$0xff]
        %v183 = vld [vmem:[#allocation2 + $0x8] sm:$0xff]
        %v184 = vld [vmem:[#allocation2 + $0x10] sm:$0xff]
        %v185 = vld [vmem:[#allocation2 + $0x18] sm:$0xff]
        %v186 = vld [vmem:[#allocation2 + $0x20] sm:$0xff]
        %v187 = vld [vmem:[#allocation2 + $0x28] sm:$0xff]
        %v188 = vld [vmem:[#allocation2 + $0x30] sm:$0xff]
        %v189 = vld [vmem:[#allocation2 + $0x38] sm:$0xff]
        %v190 = vld [vmem:[#allocation2 + $0x40] sm:$0xff]
        %v191 = vld [vmem:[#allocation2 + $0x48] sm:$0xff]
        %v192 = vld [vmem:[#allocation2 + $0x50] sm:$0xff]
        %v193 = vld [vmem:[#allocation2 + $0x58] sm:$0xff]
        %v194 = vld [vmem:[#allocation2 + $0x60] sm:$0xff]
        %v195 = vld [vmem:[#allocation2 + $0x68] sm:$0xff]
        %v196 = vld [vmem:[#allocation2 + $0x70] sm:$0xff]
        %v197 = vld [vmem:[#allocation2 + $0x78] sm:$0xff]
        %v198 = vld [vmem:[%s2] sm:$0x1]
        %v200 = vlaneseq
        %v201 = vshrl.u32 %v200, 7
        %v202 = vsub.s32 0, %v201
        %v203 = vrot.slane %v198, %v202
        %205 = vmatprep.subr.mxu0 0.0
        %206 = vmatpush1.msra.mxu0 %v182
        %207 = vmatprep.subr.mxu0 0.0
        %208 = vmatpush1.msra.mxu0 %v183
        %209 = vmatprep.subr.mxu0 0.0
        %210 = vmatpush1.msra.mxu0 %v184
        %211 = vmatprep.subr.mxu0 0.0
        %212 = vmatpush1.msra.mxu0 %v185
        %213 = vmatprep.subr.mxu0 0.0
        %214 = vmatpush1.msra.mxu0 %v186
        %215 = vmatprep.subr.mxu0 0.0
        %216 = vmatpush1.msra.mxu0 %v187
        %217 = vmatprep.subr.mxu0 0.0
        %218 = vmatpush1.msra.mxu0 %v188
        %219 = vmatprep.subr.mxu0 0.0
        %220 = vmatpush1.msra.mxu0 %v189
        %221 = vmatprep.subr.mxu0 0.0
        %222 = vmatpush1.msra.mxu0 %v190
        %223 = vmatprep.subr.mxu0 0.0
        %224 = vmatpush1.msra.mxu0 %v191
        %225 = vmatprep.subr.mxu0 0.0
        %226 = vmatpush1.msra.mxu0 %v192
        %227 = vmatprep.subr.mxu0 0.0
        %228 = vmatpush1.msra.mxu0 %v193
        %229 = vmatprep.subr.mxu0 0.0
        %230 = vmatpush1.msra.mxu0 %v194
        %231 = vmatprep.subr.mxu0 0.0
        %232 = vmatpush1.msra.mxu0 %v195
        %233 = vmatprep.subr.mxu0 0.0
        %234 = vmatpush1.msra.mxu0 %v196
        %235 = vmatprep.subr.mxu0 0.0
        %236 = vmatpush1.msra.mxu0 %v197
        %237 = vmatprep.subr.mxu0 0.0
        %238 = vmatpush1.msra.mxu0 0.0
        %239 = vmatprep.subr.mxu0 0.0
        %240 = vmatpush1.msra.mxu0 0.0
        %241 = vmatprep.subr.mxu0 0.0
        %242 = vmatpush1.msra.mxu0 0.0
        %243 = vmatprep.subr.mxu0 0.0
        %244 = vmatpush1.msra.mxu0 0.0
        %245 = vmatprep.subr.mxu0 0.0
        %246 = vmatpush1.msra.mxu0 0.0
        %247 = vmatprep.subr.mxu0 0.0
        %248 = vmatpush1.msra.mxu0 0.0
        %249 = vmatprep.subr.mxu0 0.0
        %250 = vmatpush1.msra.mxu0 0.0
        %251 = vmatprep.subr.mxu0 0.0
        %252 = vmatpush1.msra.mxu0 0.0
        %253 = vmatprep.subr.mxu0 0.0
        %254 = vmatpush1.msra.mxu0 0.0
        %255 = vmatprep.subr.mxu0 0.0
        %256 = vmatpush1.msra.mxu0 0.0
        %257 = vmatprep.subr.mxu0 0.0
        %258 = vmatpush1.msra.mxu0 0.0
        %259 = vmatprep.subr.mxu0 0.0
        %260 = vmatpush1.msra.mxu0 0.0
        %261 = vmatprep.subr.mxu0 0.0
        %262 = vmatpush1.msra.mxu0 0.0
        %263 = vmatprep.subr.mxu0 0.0
        %264 = vmatpush1.msra.mxu0 0.0
        %265 = vmatprep.subr.mxu0 0.0
        %266 = vmatpush1.msra.mxu0 0.0
        %267 = vmatprep.subr.mxu0 0.0
        %268 = vmatpush1.msra.mxu0 0.0
        %269 = vmatprep.mubr.f32.mxu0 0.0
        %270 = vmatmul.mubr.f32.gmra.mrb[0].mxu0 %v181
        %v271 = vpop.f32.mrb[0].mxu0
        %v272 = vadd.f32 %v203, %v271
        %v273 = vpop.f32.mrb[0].mxu0
        %274 = vdwg.mxu0
        %275 = vst [vmem:[%s180] sm:$0xff] %v272
        %p276 = scmp.lt.s32.totalorder %s15, 1
        %s277 = scalar_select %p276, %s15, 1
        %s278 = smul.addr %s277, 8
        %s279 = scalar_lea.vmem %s3, %s278
        // Predicated region
        $region37: #{_lambda_.1} parent=31 // pred_check
          %p280 = pneg %p101
        $region38: #{_lambda_.1} parent=31 // pred_check_branch
          %282 = sbr.rel (%p280) target = $region40
        $region39: #{_lambda_.1} parent=31 // pred_region
          _
        $region40: #{_lambda_.1} parent=31 // pred_fallthru
          _
      $region32: #{_lambda_.1} parent=5 // pred_fallthru
        _
      %p283 = scmp.le.s32.totalorder 2, %s10
      // Predicated region
      $region41: #{_lambda_.1} parent=5 // pred_check
        %p284 = pneg %p283
      $region42: #{_lambda_.1} parent=5 // pred_check_branch
        %286 = sbr.rel (%p284) target = $region44
      $region43: #{_lambda_.1} parent=5 // pred_region
        %s287 = ssub.s32 %s10, 2
        // Predicated region
        $region45: #{_lambda_.1} parent=43 // pred_check
          %p288 = pneg %p107
        $region46: #{_lambda_.1} parent=43 // pred_check_branch
          %290 = sbr.rel (%p288) target = $region48
        $region47: #{_lambda_.1} parent=43 // pred_region
          %p291 = scmp.lt.s32.totalorder %s16, 1
          %s292 = scalar_select %p291, %s16, 1
          %s293 = smul.addr %s292, 8
          %s294 = scalar_lea.vmem %s3, %s293
        $region48: #{_lambda_.1} parent=43 // pred_fallthru
          _
      $region44: #{_lambda_.1} parent=5 // pred_fallthru
        _
    $region6: #{_lambda_.1} parent=1 // loop_footer
      %s14 = sadd.s32 1, %s10
    $region7: #{_lambda_.1} parent=1 // loop_footer_branch
      %9 = sbr.rel target = $region3
    $region8: #{_lambda_.1} parent=1 // loop_exit
      _
    %295 = vsyncpa [#allocation3], 1
    %s296 = scalar_lea.sflag [#allocation3], 1
    %297 = vsyncpa %s296, 1

</llo_original>
